<compile_context>
chip_gen: v5e
topology: v5e:2x2
jax: 0.10.0
libtpu: 0.0.40
codegen_flags: <defaults>
</compile_context>

<pallas_src>
import functools
import math

import jax
import jax.numpy as jnp
from jax import lax
from jax.experimental import pallas as pl
from jax.experimental.pallas import tpu as pltpu

_EPS = 1e-8                    # F.cosine_similarity default eps (per-norm clamp)
_LN2 = math.log(2.0)
_NT = (((1,), (1,)), ((), ()))  # contract both last dims: scores = T @ N^T


def _round_up(x, m):
    return (x + m - 1) // m * m


# --------------------------------------------------------------------------
# Kernel bodies
# --------------------------------------------------------------------------
def _accumulate_scores(scores, o_ref, acc_ref, *, block_cols, acc_lanes, eup_dtype):
    """Shared init / accumulate / finalize for one (row-tile, col-tile) step."""
    j = pl.program_id(1)
    nj = pl.num_programs(1)

    @pl.when(j == 0)
    def _():
        acc_ref[...] = jnp.zeros_like(acc_ref)

    # logsigmoid(-s) = -log1p(exp(s)); rows are unit-normalized so |s| <= 1
    # and no overflow guard (min/abs) is needed.  On bf16 inputs the
    # transcendentals run in bf16 (faster EUP path on v6e/v7x).
    contrib = (-jnp.log1p(jnp.exp(scores.astype(eup_dtype)))).astype(jnp.float32)

    # Fold 128-lane groups into the wide accumulator with lane-aligned VPU
    # adds (no per-step cross-lane reduce, no lane-1 read-modify-write).
    acc = acc_ref[...]
    for g in range(block_cols // acc_lanes):
        acc = acc + contrib[:, g * acc_lanes:(g + 1) * acc_lanes]
    acc_ref[...] = acc

    @pl.when(j == nj - 1)
    def _():
        # single cross-lane (XLU) reduce per row tile
        o_ref[...] = jnp.sum(acc_ref[...], axis=-1, keepdims=True)


def _euci_neg_kernel_bf16(t_ref, n_ref, o_ref, acc_ref, *,
                          block_cols, acc_lanes, eup_dtype):
    """bf16 inputs: single DEFAULT-precision bf16 MXU pass."""
    scores = lax.dot_general(t_ref[...], n_ref[...], _NT,
                             preferred_element_type=jnp.float32)
    _accumulate_scores(scores, o_ref, acc_ref, block_cols=block_cols,
                       acc_lanes=acc_lanes, eup_dtype=eup_dtype)


def _euci_neg_kernel_f32(t_hi_ref, t_lo_ref, n_hi_ref, n_lo_ref, o_ref, acc_ref, *,
                         block_cols, acc_lanes, eup_dtype):
    """f32 inputs: manual bf16x3 (== Precision.HIGH), hi/lo precomputed in wrapper."""
    t_hi = t_hi_ref[...]
    n_hi = n_hi_ref[...]
    scores = lax.dot_general(t_hi, n_hi, _NT, preferred_element_type=jnp.float32)
    scores = scores + lax.dot_general(t_hi, n_lo_ref[...], _NT,
                                      preferred_element_type=jnp.float32)
    scores = scores + lax.dot_general(t_lo_ref[...], n_hi, _NT,
                                      preferred_element_type=jnp.float32)
    _accumulate_scores(scores, o_ref, acc_ref, block_cols=block_cols,
                       acc_lanes=acc_lanes, eup_dtype=eup_dtype)


# --------------------------------------------------------------------------
# Tiling
# --------------------------------------------------------------------------
def _select_tiles(b, d, elem_bytes_in, vmem_budget):
    # Column (neg) tile: lane/MXU friendly while minimizing padded columns.
    if b < 128:
        tn = _round_up(b, 8)
    else:
        tn = min((256, 128), key=lambda t: (_round_up(b, t) - b, -t))
    b_col_pad = _round_up(b, tn)

    # Row (target) tile: as large as practical (neg is re-streamed from HBM
    # b_row_pad/tm times -> arithmetic intensity ~ 2*tm/bytes_per_elem), while
    # minimizing padding.  For b > 512 always >= 2 row tiles so the "parallel"
    # row axis can occupy both TensorCores on megacore parts.
    if b <= 512:
        tm = _round_up(b, 8)
    else:
        tm = min((512, 448, 384, 320, 256),
                 key=lambda t: (_round_up(b, t) - b, -t))

    def vmem_use(tm_, tn_):
        return (2 * tm_ * d * elem_bytes_in      # target block(s), double buffered
                + 2 * tn_ * d * elem_bytes_in    # neg block(s), double buffered
                + 2 * tm_ * tn_ * 4              # scores / contrib temporaries
                + tm_ * 128 * 4                  # wide accumulator scratch
                + 4 * tm_ * 4)                   # output block

    while tm > 8 and vmem_use(tm, tn) > vmem_budget:
        tm = max(8, _round_up(tm // 2, 8))
    b_row_pad = _round_up(b, tm)
    return tm, tn, b_row_pad, b_col_pad


# --------------------------------------------------------------------------
# Wrapper
# --------------------------------------------------------------------------
def euci_loss(target_vec, pos_vec, neg_vec, reduction="mean"):
    """Pallas TPU implementation of EuciLoss.forward."""
    assert target_vec.shape == pos_vec.shape == neg_vec.shape
    assert target_vec.ndim == 2
    b, d = target_vec.shape

    def unit_rows(x):
        x32 = x.astype(jnp.float32)
        nrm = jnp.sqrt(jnp.sum(x32 * x32, axis=-1, keepdims=True))
        return x32 / jnp.maximum(nrm, _EPS)   # per-norm clamp (F.cosine_similarity)

    # Normalize ONCE here (O(B*D), XLA) instead of per grid step in the kernel.
    t_hat = unit_rows(target_vec)
    n_hat = unit_rows(neg_vec)

    # Positive term: O(B*D), negligible vs. the B^2*D kernel; keeps the pos
    # block out of kernel VMEM entirely.
    pos_score = jnp.sum(t_hat * unit_rows(pos_vec), axis=-1)
    pos_term = jax.nn.log_sigmoid(pos_score)

    is_bf16 = target_vec.dtype == jnp.bfloat16
    split_f32 = not is_bf16
    eup_dtype = jnp.bfloat16 if is_bf16 else jnp.float32

    # VMEM budget: ~3/4 of physical per-core VMEM, capped at 100 MiB
    # (v5e/v6e -> ~96-100 MiB, v7x -> 48 MiB of its 64 MiB per TensorCore).
    try:
        vmem_cap = int(pltpu.get_tpu_info().vmem_capacity_bytes)
    except Exception:
        vmem_cap = 64 * 1024 * 1024
    vmem_limit = min(vmem_cap * 3 // 4, 100 * 1024 * 1024)

    elem_bytes_in = 4 if split_f32 else 2   # f32 path streams hi+lo bf16 pairs
    tm, tn, b_row_pad, b_col_pad = _select_tiles(b, d, elem_bytes_in,
                                                 int(vmem_limit * 0.6))

    def pad_rows(x, n_rows):
        if x.shape[0] == n_rows:
            return x
        return jnp.pad(x, ((0, n_rows - x.shape[0]), (0, 0)))

    if split_f32:
        # bf16x3 split computed ONCE (hi/lo of unit rows); 3 MXU passes in-kernel.
        t_hi = t_hat.astype(jnp.bfloat16)
        t_lo = (t_hat - t_hi.astype(jnp.float32)).astype(jnp.bfloat16)
        n_hi = n_hat.astype(jnp.bfloat16)
        n_lo = (n_hat - n_hi.astype(jnp.float32)).astype(jnp.bfloat16)
        row_inputs = [pad_rows(t_hi, b_row_pad), pad_rows(t_lo, b_row_pad)]
        col_inputs = [pad_rows(n_hi, b_col_pad), pad_rows(n_lo, b_col_pad)]
        kernel_fn = _euci_neg_kernel_f32
    else:
        row_inputs = [pad_rows(t_hat.astype(jnp.bfloat16), b_row_pad)]
        col_inputs = [pad_rows(n_hat.astype(jnp.bfloat16), b_col_pad)]
        kernel_fn = _euci_neg_kernel_bf16

    acc_lanes = min(tn, 128)
    grid = (b_row_pad // tm, b_col_pad // tn)

    row_spec = pl.BlockSpec((tm, d), lambda i, j: (i, 0))
    col_spec = pl.BlockSpec((tn, d), lambda i, j: (j, 0))
    in_specs = [row_spec] * len(row_inputs) + [col_spec] * len(col_inputs)

    kernel = functools.partial(kernel_fn, block_cols=tn, acc_lanes=acc_lanes,
                               eup_dtype=eup_dtype)

    # Default double-buffering of the column tiles is kept; pl.Buffered(3) on
    # col_spec is an optional further step on v5e/v6e if the DMA is exposed.
    neg_sum = pl.pallas_call(
        kernel,
        out_shape=jax.ShapeDtypeStruct((b_row_pad, 1), jnp.float32),
        grid_spec=pltpu.PrefetchScalarGridSpec(
            num_scalar_prefetch=0,
            grid=grid,
            in_specs=in_specs,
            out_specs=pl.BlockSpec((tm, 1), lambda i, j: (i, 0)),
            scratch_shapes=[pltpu.VMEM((tm, acc_lanes), jnp.float32)],
        ),
        compiler_params=pltpu.CompilerParams(
            dimension_semantics=("parallel", "arbitrary"),
            vmem_limit_bytes=int(vmem_limit),
        ),
    )(*row_inputs, *col_inputs)

    # Padded (all-zero) negative columns contribute exactly logsigmoid(-0) = -ln2
    # each; remove them with a constant correction instead of per-step masks.
    pad_cols = b_col_pad - b
    neg_term = (neg_sum[:b, 0] + pad_cols * _LN2) / b

    loss = -(pos_term + neg_term)
    if reduction == "mean":
        return jnp.mean(loss)
    if reduction == "sum":
        return jnp.sum(loss)
    return loss


# --------------------------------------------------------------------------
# Plain-JAX reference (mirrors the PyTorch module) for verification
# --------------------------------------------------------------------------
def euci_loss_ref(target_vec, pos_vec, neg_vec, reduction="mean"):
    t = target_vec.astype(jnp.float32)
    p = pos_vec.astype(jnp.float32)
    n = neg_vec.astype(jnp.float32)
    t_n = jnp.maximum(jnp.linalg.norm(t, axis=-1, keepdims=True), _EPS)
    p_n = jnp.maximum(jnp.linalg.norm(p, axis=-1, keepdims=True), _EPS)
    n_n = jnp.maximum(jnp.linalg.norm(n, axis=-1, keepdims=True), _EPS)
    pos_score = jnp.sum(t * p, axis=-1) / (t_n * p_n)[:, 0]
    neg_score = jnp.dot(t, n.T, precision=lax.Precision.HIGHEST) / (t_n * n_n.T)
    loss = -(jax.nn.log_sigmoid(pos_score)
             + jnp.sum(jax.nn.log_sigmoid(-neg_score), axis=-1) / neg_score.shape[1])
    if reduction == "mean":
        return jnp.mean(loss)
    if reduction == "sum":
        return jnp.sum(loss)
    return loss


if __name__ == "__main__":
    key = jax.random.PRNGKey(0)
    ks = jax.random.split(key, 9)

    # --- primary small test (documented module shapes) ---
    batch, inner_dim = 8, 32
    target = jax.random.normal(ks[0], (batch, inner_dim), dtype=jnp.float32)
    pos = jax.random.normal(ks[1], (batch, inner_dim), dtype=jnp.float32)
    neg = jax.random.normal(ks[2], (batch, inner_dim), dtype=jnp.float32)
    for red in ("mean", "sum", "none"):
        out = jax.block_until_ready(euci_loss(target, pos, neg, reduction=red))
        ref = euci_loss_ref(target, pos, neg, reduction=red)
        assert jnp.allclose(out, ref, rtol=1e-5, atol=1e-5), (red, out, ref)

    # --- padded / multi-column-tile accumulation path ---
    b2, d2 = 300, 40
    t2 = jax.random.normal(ks[3], (b2, d2), dtype=jnp.float32)
    p2 = jax.random.normal(ks[4], (b2, d2), dtype=jnp.float32)
    n2 = jax.random.normal(ks[5], (b2, d2), dtype=jnp.float32)
    out2 = jax.block_until_ready(euci_loss(t2, p2, n2, reduction="none"))
    ref2 = euci_loss_ref(t2, p2, n2, reduction="none")
    assert jnp.allclose(out2, ref2, rtol=1e-5, atol=1e-5)
    out2m = jax.block_until_ready(euci_loss(t2, p2, n2, reduction="mean"))
    ref2m = euci_loss_ref(t2, p2, n2, reduction="mean")
    assert jnp.allclose(out2m, ref2m, rtol=1e-5, atol=1e-5), (out2m, ref2m)

    # --- multiple row tiles (parallel axis) x multiple column tiles ---
    b3, d3 = 640, 64
    t3 = jax.random.normal(ks[6], (b3, d3), dtype=jnp.float32)
    p3 = jax.random.normal(ks[7], (b3, d3), dtype=jnp.float32)
    n3 = jax.random.normal(ks[8], (b3, d3), dtype=jnp.float32)
    out3 = jax.block_until_ready(euci_loss(t3, p3, n3, reduction="none"))
    ref3 = euci_loss_ref(t3, p3, n3, reduction="none")
    assert jnp.allclose(out3, ref3, rtol=1e-5, atol=1e-5)

    print("KERNEL_OK")
</pallas_src>

<mosaic_0001>
module attributes {stable_mosaic.version = 11 : i64} {
  func.func @_euci_neg_kernel_f32(%arg0: i32, %arg1: i32, %arg2: memref<8x32xbf16, #tpu.memory_space<vmem>>, %arg3: memref<8x32xbf16, #tpu.memory_space<vmem>>, %arg4: memref<8x32xbf16, #tpu.memory_space<vmem>>, %arg5: memref<8x32xbf16, #tpu.memory_space<vmem>>, %arg6: memref<8x1xf32, #tpu.memory_space<vmem>>, %arg7: memref<8x8xf32, #tpu.memory_space<vmem>>) attributes {dimension_semantics = [#tpu.dimension_semantics<parallel>, #tpu.dimension_semantics<arbitrary>], iteration_bounds = array<i64: 1, 1>, scalar_prefetch = 0 : i64, scratch_operands = 1 : i64, tpu.core_type = #tpu.core_type<tc>, window_params = [{transform_indices = @transform_0, window_bounds = array<i64: 8, 32>}, {transform_indices = @transform_1, window_bounds = array<i64: 8, 32>}, {transform_indices = @transform_2, window_bounds = array<i64: 8, 32>}, {transform_indices = @transform_3, window_bounds = array<i64: 8, 32>}, {transform_indices = @transform_4, window_bounds = array<i64: 8, 1>}]} {
    %c0 = arith.constant 0 : index
    %c0_0 = arith.constant 0 : index
    %0 = vector.load %arg2[%c0, %c0_0] : memref<8x32xbf16, #tpu.memory_space<vmem>>, vector<8x32xbf16>
    %c0_1 = arith.constant 0 : index
    %c0_2 = arith.constant 0 : index
    %1 = vector.load %arg4[%c0_1, %c0_2] : memref<8x32xbf16, #tpu.memory_space<vmem>>, vector<8x32xbf16>
    %cst = arith.constant dense<0.000000e+00> : vector<8x8xf32>
    %2 = tpu.matmul %0, %1, %cst {dimension_numbers = #tpu.dot_dimension_numbers<[1], [1], [0], [0], [0, 0, 1, 0], [], []>} : vector<8x32xbf16>, vector<8x32xbf16>, vector<8x8xf32> -> vector<8x8xf32>
    %c0_3 = arith.constant 0 : index
    %c0_4 = arith.constant 0 : index
    %3 = vector.load %arg5[%c0_3, %c0_4] : memref<8x32xbf16, #tpu.memory_space<vmem>>, vector<8x32xbf16>
    %cst_5 = arith.constant dense<0.000000e+00> : vector<8x8xf32>
    %4 = tpu.matmul %0, %3, %cst_5 {dimension_numbers = #tpu.dot_dimension_numbers<[1], [1], [0], [0], [0, 0, 1, 0], [], []>} : vector<8x32xbf16>, vector<8x32xbf16>, vector<8x8xf32> -> vector<8x8xf32>
    %5 = arith.addf %2, %4 : vector<8x8xf32>
    %c0_6 = arith.constant 0 : index
    %c0_7 = arith.constant 0 : index
    %6 = vector.load %arg3[%c0_6, %c0_7] : memref<8x32xbf16, #tpu.memory_space<vmem>>, vector<8x32xbf16>
    %cst_8 = arith.constant dense<0.000000e+00> : vector<8x8xf32>
    %7 = tpu.matmul %6, %1, %cst_8 {dimension_numbers = #tpu.dot_dimension_numbers<[1], [1], [0], [0], [0, 0, 1, 0], [], []>} : vector<8x32xbf16>, vector<8x32xbf16>, vector<8x8xf32> -> vector<8x8xf32>
    %8 = arith.addf %5, %7 : vector<8x8xf32>
    %c0_i32 = arith.constant 0 : i32
    %9 = arith.cmpi eq, %arg1, %c0_i32 : i32
    %10 = arith.extui %9 : i1 to i32
    %c0_i32_9 = arith.constant 0 : i32
    %11 = arith.cmpi ne, %10, %c0_i32_9 : i32
    scf.if %11 {
      %cst_17 = arith.constant 0.000000e+00 : f32
      %22 = vector.broadcast %cst_17 : f32 to vector<8x8xf32>
      %c0_18 = arith.constant 0 : index
      %c0_19 = arith.constant 0 : index
      %23 = vector.load %arg7[%c0_18, %c0_19] : memref<8x8xf32, #tpu.memory_space<vmem>>, vector<8x8xf32>
      tpu.vector_store %arg7[%c0_18, %c0_19], %22 {strides = array<i32>} : memref<8x8xf32, #tpu.memory_space<vmem>>, vector<8x8xf32>,
    } else {
    }
    %12 = math.exp %8 : vector<8x8xf32>
    %13 = math.log1p %12 : vector<8x8xf32>
    %cst_10 = arith.constant 0.000000e+00 : f32
    %14 = vector.broadcast %cst_10 : f32 to vector<8x8xf32>
    %15 = arith.subf %14, %13 : vector<8x8xf32>
    %c0_11 = arith.constant 0 : index
    %c0_12 = arith.constant 0 : index
    %16 = vector.load %arg7[%c0_11, %c0_12] : memref<8x8xf32, #tpu.memory_space<vmem>>, vector<8x8xf32>
    %17 = arith.addf %16, %15 : vector<8x8xf32>
    %c0_13 = arith.constant 0 : index
    %c0_14 = arith.constant 0 : index
    %18 = vector.load %arg7[%c0_13, %c0_14] : memref<8x8xf32, #tpu.memory_space<vmem>>, vector<8x8xf32>
    tpu.vector_store %arg7[%c0_13, %c0_14], %17 {strides = array<i32>} : memref<8x8xf32, #tpu.memory_space<vmem>>, vector<8x8xf32>,
    %c0_i32_15 = arith.constant 0 : i32
    %19 = arith.cmpi eq, %arg1, %c0_i32_15 : i32
    %20 = arith.extui %19 : i1 to i32
    %c0_i32_16 = arith.constant 0 : i32
    %21 = arith.cmpi ne, %20, %c0_i32_16 : i32
    scf.if %21 {
      %c0_17 = arith.constant 0 : index
      %c0_18 = arith.constant 0 : index
      %22 = vector.load %arg7[%c0_17, %c0_18] : memref<8x8xf32, #tpu.memory_space<vmem>>, vector<8x8xf32>
      %cst_19 = arith.constant dense<0.000000e+00> : vector<8xf32>
      %23 = vector.multi_reduction <add>, %22, %cst_19 [1] : vector<8x8xf32> to vector<8xf32>
      %24 = vector.shape_cast %23 : vector<8xf32> to vector<8x1xf32>
      %c0_20 = arith.constant 0 : index
      %c0_21 = arith.constant 0 : index
      %25 = vector.load %arg6[%c0_20, %c0_21] : memref<8x1xf32, #tpu.memory_space<vmem>>, vector<8x1xf32>
      tpu.vector_store %arg6[%c0_20, %c0_21], %24 {strides = array<i32>} : memref<8x1xf32, #tpu.memory_space<vmem>>, vector<8x1xf32>,
    } else {
    }
    return
  }
  func.func @transform_0(%arg0: i32, %arg1: i32) -> (i32, i32) {
    %c0_i32 = arith.constant 0 : i32
    %c0_i32_0 = arith.constant 0 : i32
    return %arg0, %c0_i32 : i32, i32
  }
  func.func @transform_1(%arg0: i32, %arg1: i32) -> (i32, i32) {
    %c0_i32 = arith.constant 0 : i32
    %c0_i32_0 = arith.constant 0 : i32
    return %arg0, %c0_i32 : i32, i32
  }
  func.func @transform_2(%arg0: i32, %arg1: i32) -> (i32, i32) {
    %c0_i32 = arith.constant 0 : i32
    %c0_i32_0 = arith.constant 0 : i32
    return %arg1, %c0_i32 : i32, i32
  }
  func.func @transform_3(%arg0: i32, %arg1: i32) -> (i32, i32) {
    %c0_i32 = arith.constant 0 : i32
    %c0_i32_0 = arith.constant 0 : i32
    return %arg1, %c0_i32 : i32, i32
  }
  func.func @transform_4(%arg0: i32, %arg1: i32) -> (i32, i32) {
    %c0_i32 = arith.constant 0 : i32
    %c0_i32_0 = arith.constant 0 : i32
    return %arg0, %c0_i32 : i32, i32
  }
}

</mosaic_0001>

<llo_original>
// kernel: tpu_custom_call.1
$region0: #{tpu_custom_call.1}
  #allocation0 [shape = 'u32[]', space=smem, size = 0x4, offset = 0x4, fixed_abs, tag = 'smem constant byte address 0x4 - core index']
  #allocation1 [shape = 'u32[72,128]{1,0:T(1,128)}', space=vmem, size = 0x9000, scoped, tag = 'internal scratch']
  #allocation2 [shape = 'f32[8,8]{1,0:T(8,128)}', space=vmem, size = 0x1000, scoped, tag = 'scratch operand']
  %s0 = inlined_call_operand.hbm [shape: bf16[8,32], index: 0, kind: input, shape index: {}]
  %s1 = inlined_call_operand.hbm [shape: bf16[8,32], index: 1, kind: input, shape index: {}]
  %s2 = inlined_call_operand.hbm [shape: bf16[8,32], index: 2, kind: input, shape index: {}]
  %s3 = inlined_call_operand.hbm [shape: bf16[8,32], index: 3, kind: input, shape index: {}]
  %s4 = inlined_call_operand.vmem [shape: f32[8,1], index: 4, kind: output, shape index: {}]
  %s5 = sld [smem:[#allocation0]]
  $region50: #{tpu_custom_call.1} parent=0
    _
  %s7 = ssub.s32 1, %s5
  %s8 = scalar_select 0, %s7, %s5
  $region1: #{tpu_custom_call.1} parent=0
    #allocation3 [shape = 'u8[2048]{0}', space=vmem, size = 0x800, scoped, tag = 'input window, operand 0, single buffered']
    #allocation4 [shape = 's32[1]{0}', space=sflag, size = 0x4, scoped, tag = 'scoped memory for tpu_custom_call.1']
    #allocation5 [shape = 'u8[2048]{0}', space=vmem, size = 0x800, scoped, tag = 'input window, operand 1, single buffered']
    #allocation6 [shape = 's32[1]{0}', space=sflag, size = 0x4, scoped, tag = 'scoped memory for tpu_custom_call.1']
    #allocation7 [shape = 'u8[2048]{0}', space=vmem, size = 0x800, scoped, tag = 'input window, operand 2, single buffered']
    #allocation8 [shape = 'u8[2048]{0}', space=vmem, size = 0x800, scoped, tag = 'input window, operand 3, single buffered']
    #allocation9 [shape = 's32[1]{0}', space=sflag, size = 0x4, scoped, tag = 'scoped memory for tpu_custom_call.1']
    %9 = vsyncpa [#allocation4], 0
    %10 = vsyncpa [#allocation6], 0
    %11 = vsyncpa [#allocation9], 0
    // Predicated region
    $region2: #{tpu_custom_call.1} parent=1 // pred_check
      _
    $region3: #{tpu_custom_call.1} parent=1 // pred_check_branch
      %13 = sbr.rel (0) target = $region5
    $region4: #{tpu_custom_call.1} parent=1 // pred_region
      %15 = vsyncadd [#allocation4], 0
      %s17 = sshll.u32 %s0, 4
      %s18 = int_to_ptr.hbm [resolvable:$true] %s17
      %s19 = sshll.u32 [#allocation3], 4
      %s20 = int_to_ptr.vmem [resolvable:$true] %s19
      %22 = dma.hbm_to_vmem [thread:$0]  %s18, 64, %s20, [#allocation4]
    $region5: #{tpu_custom_call.1} parent=1 // pred_fallthru
      _
    // Predicated region
    $region6: #{tpu_custom_call.1} parent=1 // pred_check
      _
    $region7: #{tpu_custom_call.1} parent=1 // pred_check_branch
      %24 = sbr.rel (0) target = $region9
    $region8: #{tpu_custom_call.1} parent=1 // pred_region
      %26 = vsyncadd [#allocation6], 0
      %s28 = sshll.u32 %s1, 4
      %s29 = int_to_ptr.hbm [resolvable:$true] %s28
      %s30 = sshll.u32 [#allocation5], 4
      %s31 = int_to_ptr.vmem [resolvable:$true] %s30
      %33 = dma.hbm_to_vmem [thread:$0]  %s29, 64, %s31, [#allocation6]
    $region9: #{tpu_custom_call.1} parent=1 // pred_fallthru
      _
    // Predicated region
    $region10: #{tpu_custom_call.1} parent=1 // pred_check
      _
    $region11: #{tpu_custom_call.1} parent=1 // pred_check_branch
      %35 = sbr.rel (0) target = $region13
    $region12: #{tpu_custom_call.1} parent=1 // pred_region
      %37 = vsyncadd [#allocation6], 0
      %s39 = sshll.u32 %s2, 4
      %s40 = int_to_ptr.hbm [resolvable:$true] %s39
      %s41 = sshll.u32 [#allocation7], 4
      %s42 = int_to_ptr.vmem [resolvable:$true] %s41
      %44 = dma.hbm_to_vmem [thread:$0]  %s40, 64, %s42, [#allocation6]
    $region13: #{tpu_custom_call.1} parent=1 // pred_fallthru
      _
    // Predicated region
    $region14: #{tpu_custom_call.1} parent=1 // pred_check
      _
    $region15: #{tpu_custom_call.1} parent=1 // pred_check_branch
      %46 = sbr.rel (0) target = $region17
    $region16: #{tpu_custom_call.1} parent=1 // pred_region
      %48 = vsyncadd [#allocation9], 0
      %s50 = sshll.u32 %s3, 4
      %s51 = int_to_ptr.hbm [resolvable:$true] %s50
      %s52 = sshll.u32 [#allocation8], 4
      %s53 = int_to_ptr.vmem [resolvable:$true] %s52
      %55 = dma.hbm_to_vmem [thread:$0]  %s51, 64, %s53, [#allocation9]
    $region17: #{tpu_custom_call.1} parent=1 // pred_fallthru
      _
    // Predicated region
    $region18: #{tpu_custom_call.1} parent=1 // pred_check
      _
    $region19: #{tpu_custom_call.1} parent=1 // pred_check_branch
      %57 = sbr.rel (0) target = $region21
    $region20: #{tpu_custom_call.1} parent=1 // pred_region
      %59 = dma.done [#allocation4], 64
    $region21: #{tpu_custom_call.1} parent=1 // pred_fallthru
      _
    // Predicated region
    $region22: #{tpu_custom_call.1} parent=1 // pred_check
      _
    $region23: #{tpu_custom_call.1} parent=1 // pred_check_branch
      %61 = sbr.rel (0) target = $region25
    $region24: #{tpu_custom_call.1} parent=1 // pred_region
      %63 = dma.done [#allocation6], 64
    $region25: #{tpu_custom_call.1} parent=1 // pred_fallthru
      _
    // Predicated region
    $region26: #{tpu_custom_call.1} parent=1 // pred_check
      _
    $region27: #{tpu_custom_call.1} parent=1 // pred_check_branch
      %65 = sbr.rel (0) target = $region29
    $region28: #{tpu_custom_call.1} parent=1 // pred_region
      %67 = dma.done [#allocation6], 64
    $region29: #{tpu_custom_call.1} parent=1 // pred_fallthru
      _
    // Predicated region
    $region30: #{tpu_custom_call.1} parent=1 // pred_check
      _
    $region31: #{tpu_custom_call.1} parent=1 // pred_check_branch
      %69 = sbr.rel (0) target = $region33
    $region32: #{tpu_custom_call.1} parent=1 // pred_region
      %71 = dma.done [#allocation9], 64
    $region33: #{tpu_custom_call.1} parent=1 // pred_fallthru
      _
    %v73 = vld [vmem:[#allocation3] sm:$0xf]
    %v74 = vld [vmem:[#allocation7] sm:$0xf]
    %v75 = vld [vmem:[#allocation8] sm:$0xf]
    %vm76 = vcmask 261120
    %v78 = vsel %vm76, %v73, 0
    %v81 = vsel %vm76, %v75, 0
    %83 = vmatpush.bf16.xpose.msra.mxu0 0
    %84 = vmatpush.bf16.xpose.msra.mxu0 0
    %85 = vmatpush.bf16.xpose.msra.mxu0 0
    %86 = vmatpush.bf16.xpose.msra.mxu0 0
    %87 = vmatpush.bf16.xpose.msra.mxu0 0
    %88 = vmatpush.bf16.xpose.msra.mxu0 0
    %89 = vmatpush.bf16.xpose.msra.mxu0 0
    %90 = vmatpush.bf16.xpose.msra.mxu0 %v81
    %91 = vmatmul.bf16.gmra.mxu0 %v78
    %v92 = vpop.f32.mrf.mxu0
    %v93 = vadd.f32 0.0, %v92
    %v94 = vpop.f32.mrf.mxu0
    %95 = vdwg.mxu0
    %v97 = vsel %vm76, %v74, 0
    %99 = vmatpush.bf16.xpose.msra.mxu0 0
    %100 = vmatpush.bf16.xpose.msra.mxu0 0
    %101 = vmatpush.bf16.xpose.msra.mxu0 0
    %102 = vmatpush.bf16.xpose.msra.mxu0 0
    %103 = vmatpush.bf16.xpose.msra.mxu0 0
    %104 = vmatpush.bf16.xpose.msra.mxu0 0
    %105 = vmatpush.bf16.xpose.msra.mxu0 0
    %106 = vmatpush.bf16.xpose.msra.mxu0 %v97
    %107 = vmatmul.bf16.gmra.mxu0 %v78
    %v108 = vpop.f32.mrf.mxu0
    %v109 = vadd.f32 %v93, %v108
    %v110 = vpop.f32.mrf.mxu0
    %111 = vdwg.mxu0
    %v112 = vld [vmem:[#allocation5] sm:$0xf]
    %v114 = vsel %vm76, %v112, 0
    %116 = vmatpush.bf16.xpose.msra.mxu0 0
    %117 = vmatpush.bf16.xpose.msra.mxu0 0
    %118 = vmatpush.bf16.xpose.msra.mxu0 0
    %119 = vmatpush.bf16.xpose.msra.mxu0 0
    %120 = vmatpush.bf16.xpose.msra.mxu0 0
    %121 = vmatpush.bf16.xpose.msra.mxu0 0
    %122 = vmatpush.bf16.xpose.msra.mxu0 0
    %123 = vmatpush.bf16.xpose.msra.mxu0 %v97
    %124 = vmatmul.bf16.gmra.mxu0 %v114
    %v125 = vpop.f32.mrf.mxu0
    %v126 = vadd.f32 0.0, %v125
    %v127 = vpop.f32.mrf.mxu0
    %128 = vdwg.mxu0
    %v129 = vadd.f32 %v109, %v126
    %p130 = scmp.eq.s32.totalorder 0, 0
    // Predicated region
    $region34: #{tpu_custom_call.1} parent=1 // pred_check
      %p131 = pneg %p130
    $region35: #{tpu_custom_call.1} parent=1 // pred_check_branch
      %133 = sbr.rel (%p131) target = $region37
    $region36: #{tpu_custom_call.1} parent=1 // pred_region
      %vm134 = vcmask 64512
      %135 = vst.msk [vmem:[#allocation2] sm:$0xff] %vm134, 0.0
    $region37: #{tpu_custom_call.1} parent=1 // pred_fallthru
      _
    %v136 = vmul.f32 %v129, 1.442695
    %v137 = vpow.pop %v136
    %v138 = vadd.f32 %v137, 1.0
    %v139 = vlog2.pop %v138
    %v140 = vmul.f32 %v139, 0.6931472
    %v141 = vmul.f32 -0.5, %v137
    %v142 = vadd.f32 %v141, 1.0
    %v143 = vmul.f32 %v142, %v137
    %v144 = vand.u32 2147483647, %v137
    %vm145 = vcmp.lt.f32.partialorder %v144, 0.0004427343
    %v146 = vsel %vm145, %v143, %v140
    %v147 = vsub.f32 0.0, %v146
    %v148 = vld [vmem:[#allocation2] sm:$0xff]
    %v149 = vadd.f32 %v148, %v147
    %vm150 = vcmask 64512
    %151 = vst.msk [vmem:[#allocation2] sm:$0xff] %vm150, %v149
    // Predicated region
    $region38: #{tpu_custom_call.1} parent=1 // pred_check
      %p152 = pneg %p130
    $region39: #{tpu_custom_call.1} parent=1 // pred_check_branch
      %154 = sbr.rel (%p152) target = $region41
    $region40: #{tpu_custom_call.1} parent=1 // pred_region
      %v155 = vld [vmem:[#allocation2] sm:$0xff]
      %v156 = vsel %vm150, %v155, 0.0
      %157 = vadd.xlane.f32.xlu0 %v156
      %v158 = vpop.xlane.xlu0 %157
      %vm159 = vcmask 7168
      %160 = vst.msk [vmem:[%s4] sm:$0xff] %vm159, %v158
    $region41: #{tpu_custom_call.1} parent=1 // pred_fallthru
      _
    // Predicated region
    $region42: #{tpu_custom_call.1} parent=1 // pred_check
      _
    $region43: #{tpu_custom_call.1} parent=1 // pred_check_branch
      %162 = sbr.rel (0) target = $region45
    $region44: #{tpu_custom_call.1} parent=1 // pred_region
      _
    $region45: #{tpu_custom_call.1} parent=1 // pred_fallthru
      _
    // Predicated region
    $region46: #{tpu_custom_call.1} parent=1 // pred_check
      _
    $region47: #{tpu_custom_call.1} parent=1 // pred_check_branch
      %164 = sbr.rel (0) target = $region49
    $region48: #{tpu_custom_call.1} parent=1 // pred_region
      _
    $region49: #{tpu_custom_call.1} parent=1 // pred_fallthru
      _
    %165 = vsyncpa [#allocation4], 1
    %166 = vsyncpa [#allocation6], 1
    %167 = vsyncpa [#allocation9], 1

</llo_original>
